<compile_context>
chip_gen: v7x
topology: tpu7x:2x2x1
jax: 0.10.0
libtpu: 0.0.40
codegen_flags: <defaults>
</compile_context>

<pallas_src>
import functools

import jax
import jax.numpy as jnp
from jax import lax
from jax.experimental import pallas as pl
from jax.experimental.pallas import tpu as pltpu


# ---------------------------------------------------------------------------
# Fused kernel: Conv3x3(s) + BN + ReLU  ->  Conv3x3(1) + BN + ReLU
# ---------------------------------------------------------------------------
def _fused_conv_block_kernel(x_ref, b1_ref, bias1_ref, b2_ref, bias2_ref,
                             o_ref, xp_ref, yp_ref,
                             *, H, W, Ci, Co, Ho, Wo, stride):
    """One grid step handles NB batch elements, fully in VMEM.

    x_ref:     (NB, H,  W*Ci)   f32 lane-dense input activations
    b1_ref:    (3*W*Ci,  Wo*Co) bf16 stage-1 banded weights (BN scale folded)
    bias1_ref: (1, Wo*Co)       f32 stage-1 folded BN bias, tiled over width
    b2_ref:    (3*Wo*Co, Wo*Co) bf16 stage-2 banded weights
    bias2_ref: (1, Wo*Co)       f32
    o_ref:     (NB, Ho, Wo*Co)  f32 lane-dense output
    xp_ref:    (NB, H+2,  W*Ci)  VMEM scratch: row-padded stage-1 input
    yp_ref:    (NB, Ho+2, Wo*Co) VMEM scratch: row-padded stage-1 output
    """
    NB = x_ref.shape[0]
    WCi = W * Ci
    WoCo = Wo * Co

    # Zero ONLY the halo rows; interior rows are fully rewritten below.  Done
    # unconditionally every step: scratch is per-core and uninitialized, and a
    # core running a "parallel" grid may never see program_id(0) == 0.
    xp_ref[:, 0:1, :] = jnp.zeros((NB, 1, WCi), jnp.float32)
    xp_ref[:, H + 1:H + 2, :] = jnp.zeros((NB, 1, WCi), jnp.float32)
    yp_ref[:, 0:1, :] = jnp.zeros((NB, 1, WoCo), jnp.float32)
    yp_ref[:, Ho + 1:Ho + 2, :] = jnp.zeros((NB, 1, WoCo), jnp.float32)

    # ---- stage 1: Conv3x3(stride) + BN + ReLU -------------------------------
    # Row (height) zero-padding via the scratch halo; width padding is folded
    # into the banded weight.
    xp_ref[:, 1:H + 1, :] = x_ref[...]

    if stride == 1:
        wins1 = [xp_ref[:, kh:kh + Ho, :] for kh in range(3)]
    else:
        xp = xp_ref[...]
        wins1 = [lax.slice(xp, (0, kh, 0),
                           (NB, kh + (Ho - 1) * stride + 1, WCi),
                           (1, stride, 1)) for kh in range(3)]
    a1 = jnp.concatenate(wins1, axis=-1).reshape(NB * Ho, 3 * WCi)
    y1 = jnp.dot(a1.astype(jnp.bfloat16), b1_ref[...],
                 preferred_element_type=jnp.float32)
    y1 = jnp.maximum(y1 + bias1_ref[...], 0.0)               # (NB*Ho, Wo*Co)

    # ---- stage 2: Conv3x3(1) + BN + ReLU (stage-1 act. never leaves VMEM) ---
    yp_ref[:, 1:Ho + 1, :] = y1.reshape(NB, Ho, WoCo)
    a2 = jnp.concatenate([yp_ref[:, kh:kh + Ho, :] for kh in range(3)],
                         axis=-1).reshape(NB * Ho, 3 * WoCo)
    y2 = jnp.dot(a2.astype(jnp.bfloat16), b2_ref[...],
                 preferred_element_type=jnp.float32)
    y2 = jnp.maximum(y2 + bias2_ref[...], 0.0)               # (NB*Ho, Wo*Co)

    o_ref[...] = y2.reshape(NB, Ho, WoCo).astype(o_ref.dtype)


# ---------------------------------------------------------------------------
# Wrapper-side parameter transforms (one-time, outside the kernel)
# ---------------------------------------------------------------------------
def _fold_bn(gamma, beta, running_mean, running_var, eps=1e-5):
    scale = gamma / jnp.sqrt(running_var + eps)
    bias = beta - running_mean * scale
    return scale, bias


def _build_band_weight(w_hwio, scale, w_in, w_out, stride):
    """Banded conv-as-GEMM weight (f32).

    Returns B of shape (3, w_in*Ci, w_out*Co) with
      B[kh, b*Ci+ci, w*Co+co] = w[kh,kw,ci,co]*scale[co]   where b == w*stride+kw-1
    Out-of-range b (width padding) contributes nothing (zero padding).
    """
    _, _, Ci, Co = w_hwio.shape
    wf = w_hwio * scale[None, None, None, :]                 # fold BN scale (f32)
    b_idx = jnp.arange(w_in)[None, :, None]                  # (1, w_in, 1)
    w_idx = jnp.arange(w_out)[None, None, :]                 # (1, 1, w_out)
    kw_idx = jnp.arange(3)[:, None, None]                    # (3, 1, 1)
    ind = (b_idx == w_idx * stride + kw_idx - 1).astype(wf.dtype)
    band = jnp.einsum("xpw,hxio->hpiwo", ind, wf)            # (3,w_in,Ci,w_out,Co)
    return band.reshape(3, w_in * Ci, w_out * Co)


def _pick_batch_block(N, Ho, m_target=256):
    """Batch rows per grid step.

    Aim for GEMM M = nb*Ho near the MXU height (128 on v5e, 256 on v6e/v7x),
    but keep >=2 grid steps when possible so both v7x TensorCores (which are
    sharded across the "parallel" grid axis) get work.
    """
    nb = max(1, min(N, m_target // max(Ho, 1)))
    while N % nb:
        nb -= 1
    if N // nb < 2 and N > 1:
        half = N // 2
        while half >= 1 and N % half:
            half -= 1
        nb = max(1, half)
    return nb


def conv_block_forward(params, x_nchw, stride=1, batch_block=None):
    """Matches ConvBlock.forward: input/output in NCHW like PyTorch (f32)."""
    N, Ci, H, W = x_nchw.shape
    Co = params["w1"].shape[-1]
    Ho = (H - 1) // stride + 1                               # pad=1, k=3
    Wo = (W - 1) // stride + 1

    s1, bb1 = _fold_bn(*params["bn1"])
    s2, bb2 = _fold_bn(*params["bn2"])

    # Banded weights: fold BN scale in f32, then cast to bf16 MXU operands.
    band1 = _build_band_weight(params["w1"], s1, W, Wo, stride)
    band1 = band1.reshape(3 * W * Ci, Wo * Co).astype(jnp.bfloat16)
    band2 = _build_band_weight(params["w2"], s2, Wo, Wo, 1)
    band2 = band2.reshape(3 * Wo * Co, Wo * Co).astype(jnp.bfloat16)
    bias1 = jnp.tile(bb1, Wo).reshape(1, Wo * Co)            # f32 epilogue
    bias2 = jnp.tile(bb2, Wo).reshape(1, Wo * Co)

    # NCHW -> lane-dense (N, H, W*Ci)
    x2d = jnp.transpose(x_nchw, (0, 2, 3, 1)).reshape(N, H, W * Ci)

    nb = _pick_batch_block(N, Ho) if batch_block is None else batch_block
    assert N % nb == 0, (N, nb)

    # Rough per-step VMEM footprint (double-buffered in/out + weights + scratch),
    # with headroom kept under v7x's 64 MiB.
    footprint = (2 * nb * H * W * Ci * 4 +
                 2 * 3 * W * Ci * Wo * Co * 2 +
                 2 * 3 * Wo * Co * Wo * Co * 2 +
                 2 * nb * Ho * Wo * Co * 4 +
                 nb * (H + 2) * W * Ci * 4 +
                 nb * (Ho + 2) * Wo * Co * 4)
    vmem_limit = int(min(48 * 1024 * 1024, max(16 * 1024 * 1024, 2 * footprint)))

    kernel = functools.partial(
        _fused_conv_block_kernel,
        H=H, W=W, Ci=Ci, Co=Co, Ho=Ho, Wo=Wo, stride=stride)

    out2d = pl.pallas_call(
        kernel,
        out_shape=jax.ShapeDtypeStruct((N, Ho, Wo * Co), jnp.float32),
        grid=(N // nb,),
        in_specs=[
            pl.BlockSpec((nb, H, W * Ci), lambda i: (i, 0, 0)),
            pl.BlockSpec((3 * W * Ci, Wo * Co), lambda i: (0, 0)),
            pl.BlockSpec((1, Wo * Co), lambda i: (0, 0)),
            pl.BlockSpec((3 * Wo * Co, Wo * Co), lambda i: (0, 0)),
            pl.BlockSpec((1, Wo * Co), lambda i: (0, 0)),
        ],
        out_specs=pl.BlockSpec((nb, Ho, Wo * Co), lambda i: (i, 0, 0)),
        scratch_shapes=[
            pltpu.VMEM((nb, H + 2, W * Ci), jnp.float32),
            pltpu.VMEM((nb, Ho + 2, Wo * Co), jnp.float32),
        ],
        compiler_params=pltpu.CompilerParams(
            dimension_semantics=("parallel",),
            vmem_limit_bytes=vmem_limit),
    )(x2d, band1, bias1, band2, bias2)

    # lane-dense (N, Ho, Wo*Co) -> NCHW (wrapper-side layout plumbing)
    return jnp.transpose(out2d.reshape(N, Ho, Wo, Co), (0, 3, 1, 2))


# ---------------------------------------------------------------------------
# Parameters + pure-JAX reference
# ---------------------------------------------------------------------------
def init_conv_block_params(key, in_channels, out_channels):
    """Deterministic synthetic parameters matching the PyTorch module shapes."""
    ks = jax.random.split(key, 8)
    w1 = 0.1 * jax.random.normal(ks[0], (out_channels, in_channels, 3, 3),
                                 jnp.float32)
    w2 = 0.1 * jax.random.normal(ks[1], (out_channels, out_channels, 3, 3),
                                 jnp.float32)
    w1 = jnp.transpose(w1, (2, 3, 1, 0))   # OIHW -> HWIO
    w2 = jnp.transpose(w2, (2, 3, 1, 0))
    gamma1 = 1.0 + 0.1 * jax.random.normal(ks[2], (out_channels,), jnp.float32)
    beta1 = 0.1 * jax.random.normal(ks[3], (out_channels,), jnp.float32)
    mean1 = 0.05 * jax.random.normal(ks[4], (out_channels,), jnp.float32)
    var1 = 1.0 + 0.1 * jax.random.uniform(ks[5], (out_channels,), jnp.float32)
    gamma2 = 1.0 + 0.1 * jax.random.normal(ks[6], (out_channels,), jnp.float32)
    beta2 = 0.1 * jax.random.normal(ks[7], (out_channels,), jnp.float32)
    mean2 = jnp.zeros((out_channels,), jnp.float32)
    var2 = jnp.ones((out_channels,), jnp.float32)
    return {
        "w1": w1, "bn1": (gamma1, beta1, mean1, var1),
        "w2": w2, "bn2": (gamma2, beta2, mean2, var2),
    }


def _reference_forward(params, x_nchw, stride=1, quantize_operands=False):
    """Pure-JAX reference (lax.conv).

    quantize_operands=True rounds the conv operands to bf16 (then convolves in
    f32) so it matches the kernel's bf16 MXU operands + f32 accumulator
    bit-closely; quantize_operands=False is the plain f32 module semantics.
    """
    def q(a):
        return a.astype(jnp.bfloat16).astype(jnp.float32) if quantize_operands else a

    x = jnp.transpose(x_nchw, (0, 2, 3, 1))
    dn = ("NHWC", "HWIO", "NHWC")

    def stage(xi, w, bn, s):
        scale, bias = _fold_bn(*bn)
        y = lax.conv_general_dilated(
            q(xi), q(w * scale[None, None, None, :]), (s, s), ((1, 1), (1, 1)),
            dimension_numbers=dn, precision=lax.Precision.HIGHEST)
        return jnp.maximum(y + bias, 0.0)

    y = stage(x, params["w1"], params["bn1"], stride)
    y = stage(y, params["w2"], params["bn2"], 1)
    return jnp.transpose(y, (0, 3, 1, 2))


if __name__ == "__main__":
    N, C_IN, C_OUT, H, W = 2, 4, 8, 16, 16
    STRIDE = 1

    key = jax.random.PRNGKey(0)
    k_x, k_p = jax.random.split(key)
    x = jax.random.normal(k_x, (N, C_IN, H, W), jnp.float32)   # NCHW like PyTorch
    params = init_conv_block_params(k_p, C_IN, C_OUT)

    out = conv_block_forward(params, x, stride=STRIDE)
    out = jax.block_until_ready(out)

    # Structural check: reference using the SAME bf16-rounded operands with f32
    # accumulation -> only summation-order differences should remain.
    ref_bf16 = jax.block_until_ready(
        _reference_forward(params, x, stride=STRIDE, quantize_operands=True))
    # End-to-end check vs the pure-f32 module semantics, with a tolerance
    # budget for the bf16 MXU operands.
    ref_f32 = jax.block_until_ready(
        _reference_forward(params, x, stride=STRIDE, quantize_operands=False))

    assert out.shape == ref_f32.shape, (out.shape, ref_f32.shape)
    assert jnp.allclose(out, ref_bf16, atol=1e-3, rtol=1e-3), \
        "mismatch vs bf16-operand reference"
    assert jnp.allclose(out, ref_f32, atol=2e-2, rtol=2e-2), \
        "mismatch vs f32 reference"

    print("KERNEL_OK")
</pallas_src>

<mosaic_0001>
module attributes {stable_mosaic.version = 11 : i64} {
  func.func @_fused_conv_block_kernel(%arg0: i32, %arg1: memref<1x16x64xf32, #tpu.memory_space<vmem>>, %arg2: memref<192x128xbf16, #tpu.memory_space<vmem>>, %arg3: memref<1x128xf32, #tpu.memory_space<vmem>>, %arg4: memref<384x128xbf16, #tpu.memory_space<vmem>>, %arg5: memref<1x128xf32, #tpu.memory_space<vmem>>, %arg6: memref<1x16x128xf32, #tpu.memory_space<vmem>>, %arg7: memref<1x18x64xf32, #tpu.memory_space<vmem>>, %arg8: memref<1x18x128xf32, #tpu.memory_space<vmem>>) attributes {dimension_semantics = [#tpu.dimension_semantics<parallel>], iteration_bounds = array<i64: 2>, scalar_prefetch = 0 : i64, scratch_operands = 2 : i64, tpu.core_type = #tpu.core_type<tc>, window_params = [{transform_indices = @transform_0, window_bounds = array<i64: 1, 16, 64>}, {pipeline_mode = #tpu.pipeline_mode<synchronous>, transform_indices = @transform_1, window_bounds = array<i64: 192, 128>}, {pipeline_mode = #tpu.pipeline_mode<synchronous>, transform_indices = @transform_2, window_bounds = array<i64: 1, 128>}, {pipeline_mode = #tpu.pipeline_mode<synchronous>, transform_indices = @transform_3, window_bounds = array<i64: 384, 128>}, {pipeline_mode = #tpu.pipeline_mode<synchronous>, transform_indices = @transform_4, window_bounds = array<i64: 1, 128>}, {transform_indices = @transform_5, window_bounds = array<i64: 1, 16, 128>}]} {
    %cst = arith.constant 0.000000e+00 : f32
    %0 = vector.broadcast %cst : f32 to vector<1x1x64xf32>
    %c0 = arith.constant 0 : index
    %c0_0 = arith.constant 0 : index
    %c0_1 = arith.constant 0 : index
    %1 = vector.load %arg7[%c0, %c0_0, %c0_1] : memref<1x18x64xf32, #tpu.memory_space<vmem>>, vector<1x1x64xf32>
    tpu.vector_store %arg7[%c0, %c0_0, %c0_1], %0 {strides = array<i32>} : memref<1x18x64xf32, #tpu.memory_space<vmem>>, vector<1x1x64xf32>,
    %cst_2 = arith.constant 0.000000e+00 : f32
    %2 = vector.broadcast %cst_2 : f32 to vector<1x1x64xf32>
    %c0_3 = arith.constant 0 : index
    %c17 = arith.constant 17 : index
    %c0_4 = arith.constant 0 : index
    %3 = vector.load %arg7[%c0_3, %c17, %c0_4] : memref<1x18x64xf32, #tpu.memory_space<vmem>>, vector<1x1x64xf32>
    tpu.vector_store %arg7[%c0_3, %c17, %c0_4], %2 {strides = array<i32>} : memref<1x18x64xf32, #tpu.memory_space<vmem>>, vector<1x1x64xf32>,
    %cst_5 = arith.constant 0.000000e+00 : f32
    %4 = vector.broadcast %cst_5 : f32 to vector<1x1x128xf32>
    %c0_6 = arith.constant 0 : index
    %c0_7 = arith.constant 0 : index
    %c0_8 = arith.constant 0 : index
    %5 = vector.load %arg8[%c0_6, %c0_7, %c0_8] : memref<1x18x128xf32, #tpu.memory_space<vmem>>, vector<1x1x128xf32>
    tpu.vector_store %arg8[%c0_6, %c0_7, %c0_8], %4 {strides = array<i32>} : memref<1x18x128xf32, #tpu.memory_space<vmem>>, vector<1x1x128xf32>,
    %cst_9 = arith.constant 0.000000e+00 : f32
    %6 = vector.broadcast %cst_9 : f32 to vector<1x1x128xf32>
    %c0_10 = arith.constant 0 : index
    %c17_11 = arith.constant 17 : index
    %c0_12 = arith.constant 0 : index
    %7 = vector.load %arg8[%c0_10, %c17_11, %c0_12] : memref<1x18x128xf32, #tpu.memory_space<vmem>>, vector<1x1x128xf32>
    tpu.vector_store %arg8[%c0_10, %c17_11, %c0_12], %6 {strides = array<i32>} : memref<1x18x128xf32, #tpu.memory_space<vmem>>, vector<1x1x128xf32>,
    %c0_13 = arith.constant 0 : index
    %c0_14 = arith.constant 0 : index
    %c0_15 = arith.constant 0 : index
    %8 = vector.load %arg1[%c0_13, %c0_14, %c0_15] : memref<1x16x64xf32, #tpu.memory_space<vmem>>, vector<1x16x64xf32>
    %c0_16 = arith.constant 0 : index
    %c1 = arith.constant 1 : index
    %c0_17 = arith.constant 0 : index
    %9 = vector.load %arg7[%c0_16, %c1, %c0_17] : memref<1x18x64xf32, #tpu.memory_space<vmem>>, vector<1x16x64xf32>
    tpu.vector_store %arg7[%c0_16, %c1, %c0_17], %8 {strides = array<i32>} : memref<1x18x64xf32, #tpu.memory_space<vmem>>, vector<1x16x64xf32>,
    %c0_18 = arith.constant 0 : index
    %c0_19 = arith.constant 0 : index
    %c0_20 = arith.constant 0 : index
    %10 = vector.load %arg7[%c0_18, %c0_19, %c0_20] : memref<1x18x64xf32, #tpu.memory_space<vmem>>, vector<1x16x64xf32>
    %c0_21 = arith.constant 0 : index
    %c1_22 = arith.constant 1 : index
    %c0_23 = arith.constant 0 : index
    %11 = vector.load %arg7[%c0_21, %c1_22, %c0_23] : memref<1x18x64xf32, #tpu.memory_space<vmem>>, vector<1x16x64xf32>
    %c0_24 = arith.constant 0 : index
    %c2 = arith.constant 2 : index
    %c0_25 = arith.constant 0 : index
    %12 = vector.load %arg7[%c0_24, %c2, %c0_25] : memref<1x18x64xf32, #tpu.memory_space<vmem>>, vector<1x16x64xf32>
    %13 = tpu.concatenate %10, %11, %12 in 2 : vector<1x16x64xf32>, vector<1x16x64xf32>, vector<1x16x64xf32> -> vector<1x16x192xf32>
    %14 = vector.shape_cast %13 : vector<1x16x192xf32> to vector<16x192xf32>
    %15 = arith.truncf %14 : vector<16x192xf32> to vector<16x192xbf16>
    %c0_26 = arith.constant 0 : index
    %c0_27 = arith.constant 0 : index
    %16 = vector.load %arg2[%c0_26, %c0_27] : memref<192x128xbf16, #tpu.memory_space<vmem>>, vector<192x128xbf16>
    %cst_28 = arith.constant dense<0.000000e+00> : vector<16x128xf32>
    %17 = tpu.matmul %15, %16, %cst_28 {dimension_numbers = #tpu.dot_dimension_numbers<[1], [0], [0], [1], [0, 0, 1, 1], [], []>} : vector<16x192xbf16>, vector<192x128xbf16>, vector<16x128xf32> -> vector<16x128xf32>
    %c0_29 = arith.constant 0 : index
    %c0_30 = arith.constant 0 : index
    %18 = vector.load %arg3[%c0_29, %c0_30] : memref<1x128xf32, #tpu.memory_space<vmem>>, vector<1x128xf32>
    %19 = vector.broadcast %18 : vector<1x128xf32> to vector<16x128xf32>
    %20 = arith.addf %17, %19 : vector<16x128xf32>
    %cst_31 = arith.constant 0.000000e+00 : f32
    %21 = vector.broadcast %cst_31 : f32 to vector<16x128xf32>
    %22 = arith.maximumf %20, %21 : vector<16x128xf32>
    %23 = vector.shape_cast %22 : vector<16x128xf32> to vector<1x16x128xf32>
    %c0_32 = arith.constant 0 : index
    %c1_33 = arith.constant 1 : index
    %c0_34 = arith.constant 0 : index
    %24 = vector.load %arg8[%c0_32, %c1_33, %c0_34] : memref<1x18x128xf32, #tpu.memory_space<vmem>>, vector<1x16x128xf32>
    tpu.vector_store %arg8[%c0_32, %c1_33, %c0_34], %23 {strides = array<i32>} : memref<1x18x128xf32, #tpu.memory_space<vmem>>, vector<1x16x128xf32>,
    %c0_35 = arith.constant 0 : index
    %c0_36 = arith.constant 0 : index
    %c0_37 = arith.constant 0 : index
    %25 = vector.load %arg8[%c0_35, %c0_36, %c0_37] : memref<1x18x128xf32, #tpu.memory_space<vmem>>, vector<1x16x128xf32>
    %c0_38 = arith.constant 0 : index
    %c1_39 = arith.constant 1 : index
    %c0_40 = arith.constant 0 : index
    %26 = vector.load %arg8[%c0_38, %c1_39, %c0_40] : memref<1x18x128xf32, #tpu.memory_space<vmem>>, vector<1x16x128xf32>
    %c0_41 = arith.constant 0 : index
    %c2_42 = arith.constant 2 : index
    %c0_43 = arith.constant 0 : index
    %27 = vector.load %arg8[%c0_41, %c2_42, %c0_43] : memref<1x18x128xf32, #tpu.memory_space<vmem>>, vector<1x16x128xf32>
    %28 = tpu.concatenate %25, %26, %27 in 2 : vector<1x16x128xf32>, vector<1x16x128xf32>, vector<1x16x128xf32> -> vector<1x16x384xf32>
    %29 = vector.shape_cast %28 : vector<1x16x384xf32> to vector<16x384xf32>
    %30 = arith.truncf %29 : vector<16x384xf32> to vector<16x384xbf16>
    %c0_44 = arith.constant 0 : index
    %c0_45 = arith.constant 0 : index
    %31 = vector.load %arg4[%c0_44, %c0_45] : memref<384x128xbf16, #tpu.memory_space<vmem>>, vector<384x128xbf16>
    %cst_46 = arith.constant dense<0.000000e+00> : vector<16x128xf32>
    %32 = tpu.matmul %30, %31, %cst_46 {dimension_numbers = #tpu.dot_dimension_numbers<[1], [0], [0], [1], [0, 0, 1, 1], [], []>} : vector<16x384xbf16>, vector<384x128xbf16>, vector<16x128xf32> -> vector<16x128xf32>
    %c0_47 = arith.constant 0 : index
    %c0_48 = arith.constant 0 : index
    %33 = vector.load %arg5[%c0_47, %c0_48] : memref<1x128xf32, #tpu.memory_space<vmem>>, vector<1x128xf32>
    %34 = vector.broadcast %33 : vector<1x128xf32> to vector<16x128xf32>
    %35 = arith.addf %32, %34 : vector<16x128xf32>
    %cst_49 = arith.constant 0.000000e+00 : f32
    %36 = vector.broadcast %cst_49 : f32 to vector<16x128xf32>
    %37 = arith.maximumf %35, %36 : vector<16x128xf32>
    %38 = vector.shape_cast %37 : vector<16x128xf32> to vector<1x16x128xf32>
    %c0_50 = arith.constant 0 : index
    %c0_51 = arith.constant 0 : index
    %c0_52 = arith.constant 0 : index
    %39 = vector.load %arg6[%c0_50, %c0_51, %c0_52] : memref<1x16x128xf32, #tpu.memory_space<vmem>>, vector<1x16x128xf32>
    tpu.vector_store %arg6[%c0_50, %c0_51, %c0_52], %38 {strides = array<i32>} : memref<1x16x128xf32, #tpu.memory_space<vmem>>, vector<1x16x128xf32>,
    return
  }
  func.func @transform_0(%arg0: i32) -> (i32, i32, i32) {
    %c0_i32 = arith.constant 0 : i32
    %c0_i32_0 = arith.constant 0 : i32
    %c0_i32_1 = arith.constant 0 : i32
    return %arg0, %c0_i32, %c0_i32_0 : i32, i32, i32
  }
  func.func @transform_1(%arg0: i32) -> (i32, i32) {
    %c0_i32 = arith.constant 0 : i32
    %c0_i32_0 = arith.constant 0 : i32
    %c0_i32_1 = arith.constant 0 : i32
    return %c0_i32, %c0_i32_0 : i32, i32
  }
  func.func @transform_2(%arg0: i32) -> (i32, i32) {
    %c0_i32 = arith.constant 0 : i32
    %c0_i32_0 = arith.constant 0 : i32
    %c0_i32_1 = arith.constant 0 : i32
    return %c0_i32, %c0_i32_0 : i32, i32
  }
  func.func @transform_3(%arg0: i32) -> (i32, i32) {
    %c0_i32 = arith.constant 0 : i32
    %c0_i32_0 = arith.constant 0 : i32
    %c0_i32_1 = arith.constant 0 : i32
    return %c0_i32, %c0_i32_0 : i32, i32
  }
  func.func @transform_4(%arg0: i32) -> (i32, i32) {
    %c0_i32 = arith.constant 0 : i32
    %c0_i32_0 = arith.constant 0 : i32
    %c0_i32_1 = arith.constant 0 : i32
    return %c0_i32, %c0_i32_0 : i32, i32
  }
  func.func @transform_5(%arg0: i32) -> (i32, i32, i32) {
    %c0_i32 = arith.constant 0 : i32
    %c0_i32_0 = arith.constant 0 : i32
    %c0_i32_1 = arith.constant 0 : i32
    return %arg0, %c0_i32, %c0_i32_0 : i32, i32, i32
  }
}

</mosaic_0001>

<llo_original>
// kernel: tpu_custom_call.1
$region0: #{tpu_custom_call.1}
  #allocation0 [shape = 'u32[]', space=smem, size = 0x4, offset = 0x4, fixed_abs, tag = 'smem constant byte address 0x4 - core index']
  #allocation1 [shape = 'u32[144,128]{1,0:T(1,128)}', space=vmem, size = 0x12000, scoped, tag = 'internal scratch']
  #allocation2 [shape = 'f32[1,18,64]{2,1,0:T(8,128)}', space=vmem, size = 0x3000, scoped, tag = 'scratch operand']
  #allocation3 [shape = 'f32[1,18,128]{2,1,0:T(8,128)}', space=vmem, size = 0x3000, scoped, tag = 'scratch operand']
  %s0 = inlined_call_operand.hbm [shape: f32[2,16,64], index: 0, kind: input, shape index: {}]
  %s1 = inlined_call_operand.hbm [shape: bf16[192,128], index: 1, kind: input, shape index: {}]
  %s2 = inlined_call_operand.vmem [shape: f32[1,128], index: 2, kind: input, shape index: {}]
  %s3 = inlined_call_operand.hbm [shape: bf16[384,128], index: 3, kind: input, shape index: {}]
  %s4 = inlined_call_operand.vmem [shape: f32[1,128], index: 4, kind: input, shape index: {}]
  %s5 = inlined_call_operand.hbm [shape: f32[2,16,128], index: 5, kind: output, shape index: {}]
  %s6 = sld [smem:[#allocation0]]
  $region65: #{tpu_custom_call.1} parent=0
    _
  %s8 = ssub.s32 1, %s6
  %s9 = scalar_select 0, %s8, %s6
  $region1: #{tpu_custom_call.1} parent=0
    #allocation4 [shape = 'u8[16384]{0}', space=vmem, size = 0x4000, scoped, tag = 'input window, operand 0']
    #allocation5 [shape = 's32[2]{0}', space=sflag, size = 0x8, scoped, tag = 'scoped memory for tpu_custom_call.1']
    #allocation6 [shape = 's32[2]{0}', space=sflag, size = 0x8, scoped, tag = 'scoped memory for tpu_custom_call.1']
    #allocation7 [shape = 'u8[49152]{0}', space=vmem, size = 0xc000, scoped, tag = 'input window, operand 1, single buffered']
    #allocation8 [shape = 's32[1]{0}', space=sflag, size = 0x4, scoped, tag = 'scoped memory for tpu_custom_call.1']
    #allocation9 [shape = 'u8[98304]{0}', space=vmem, size = 0x18000, scoped, tag = 'input window, operand 3, single buffered']
    #allocation10 [shape = 'u8[16384]{0}', space=vmem, size = 0x4000, scoped, tag = 'output window, operand 0']
    %10 = vsyncpa [#allocation5], 0
    %s11 = scalar_lea.sflag [#allocation5], 1
    %12 = vsyncpa %s11, 0
    %13 = vsyncpa [#allocation8], 0
    %14 = vsyncpa [#allocation6], 0
    %s15 = scalar_lea.sflag [#allocation6], 1
    %16 = vsyncpa %s15, 0
    loop: start=0, step=1, limit=4
    $region2: #{tpu_custom_call.1} parent=1 // loop_pre_header
      _
    $region3: #{tpu_custom_call.1} parent=1 // loop_header
      %s18 = sphi 0, %s22
      %p19 = scmp.ge.s32.totalorder %s18, 4
      %s28 = sphi 0, %s30
      %s31 = sphi 0, %s28
      %s32 = sphi 0, %s31
      %s48 = sphi 0, %s32
      %s52 = sphi 0, %s52
      %s54 = sphi 0, %s52
      %s55 = sphi 0, %s54
      %s69 = sphi 0, %s55
      %s73 = sphi 0, %s73
      %s75 = sphi 0, %s73
      %s76 = sphi 0, %s75
      %s90 = sphi 0, %s76
      %s94 = sphi 0, %s94
      %s96 = sphi 0, %s94
      %s97 = sphi 0, %s96
      %s111 = sphi 0, %s97
      %s115 = sphi 0, %s115
      %s117 = sphi 0, %s115
      %s118 = sphi 0, %s117
      %s132 = sphi 0, %s118
      %s138 = sphi 0, %s140
      %s141 = sphi 0, %s138
      %s142 = sphi 0, %s141
      %s158 = sphi 0, %s142
    $region4: #{tpu_custom_call.1} parent=1 // loop_header_branch
      %21 = sbr.rel (%p19) target = $region8
    $region5: #{tpu_custom_call.1} parent=1 // loop_body
      %s23 = ssub.s32 %s18, 1
      %s24 = ssub.s32 %s18, 2
      %s25 = sadd.s32 %s18, 1
      %s26 = ssub.s32 %s18, %s25
      %p27 = scmp.eq.s32.totalorder %s26, 0
      %s29 = sadd.s32 %s28, 1
      %s30 = scalar_select %p27, %s28, %s29
      %p33 = pneg %p27
      %p34 = scmp.eq.s32.totalorder %s18, 1
      %p35 = por %p33, %p34
      %p36 = scmp.ne.s32.totalorder %s28, %s31
      %p37 = scmp.eq.s32.totalorder %s18, 0
      %p38 = por %p36, %p37
      %p39 = scmp.ne.s32.totalorder %s28, %s31
      %p40 = scmp.eq.s32.totalorder %s23, 1
      %p41 = por %p39, %p40
      %p42 = scmp.ne.s32.totalorder %s31, %s32
      %p43 = scmp.eq.s32.totalorder %s23, 0
      %p44 = por %p42, %p43
      %p45 = scmp.ne.s32.totalorder %s31, %s32
      %p46 = scmp.eq.s32.totalorder %s24, 1
      %p47 = por %p45, %p46
      %p49 = scmp.ne.s32.totalorder %s32, %s48
      %p50 = scmp.eq.s32.totalorder %s24, 0
      %p51 = por %p49, %p50
      %s53 = sadd.s32 %s52, 1
      %p56 = scmp.eq.s32.totalorder %s18, 1
      %p57 = scmp.ne.s32.totalorder %s52, %s54
      %p58 = scmp.eq.s32.totalorder %s18, 0
      %p59 = por %p57, %p58
      %p60 = scmp.ne.s32.totalorder %s52, %s54
      %p61 = scmp.eq.s32.totalorder %s23, 1
      %p62 = por %p60, %p61
      %p63 = scmp.ne.s32.totalorder %s54, %s55
      %p64 = scmp.eq.s32.totalorder %s23, 0
      %p65 = por %p63, %p64
      %p66 = scmp.ne.s32.totalorder %s54, %s55
      %p67 = scmp.eq.s32.totalorder %s24, 1
      %p68 = por %p66, %p67
      %p70 = scmp.ne.s32.totalorder %s55, %s69
      %p71 = scmp.eq.s32.totalorder %s24, 0
      %p72 = por %p70, %p71
      %s74 = sadd.s32 %s73, 1
      %p77 = scmp.eq.s32.totalorder %s18, 1
      %p78 = scmp.ne.s32.totalorder %s73, %s75
      %p79 = scmp.eq.s32.totalorder %s18, 0
      %p80 = por %p78, %p79
      %p81 = scmp.ne.s32.totalorder %s73, %s75
      %p82 = scmp.eq.s32.totalorder %s23, 1
      %p83 = por %p81, %p82
      %p84 = scmp.ne.s32.totalorder %s75, %s76
      %p85 = scmp.eq.s32.totalorder %s23, 0
      %p86 = por %p84, %p85
      %p87 = scmp.ne.s32.totalorder %s75, %s76
      %p88 = scmp.eq.s32.totalorder %s24, 1
      %p89 = por %p87, %p88
      %p91 = scmp.ne.s32.totalorder %s76, %s90
      %p92 = scmp.eq.s32.totalorder %s24, 0
      %p93 = por %p91, %p92
      %s95 = sadd.s32 %s94, 1
      %p98 = scmp.eq.s32.totalorder %s18, 1
      %p99 = scmp.ne.s32.totalorder %s94, %s96
      %p100 = scmp.eq.s32.totalorder %s18, 0
      %p101 = por %p99, %p100
      %p102 = scmp.ne.s32.totalorder %s94, %s96
      %p103 = scmp.eq.s32.totalorder %s23, 1
      %p104 = por %p102, %p103
      %p105 = scmp.ne.s32.totalorder %s96, %s97
      %p106 = scmp.eq.s32.totalorder %s23, 0
      %p107 = por %p105, %p106
      %p108 = scmp.ne.s32.totalorder %s96, %s97
      %p109 = scmp.eq.s32.totalorder %s24, 1
      %p110 = por %p108, %p109
      %p112 = scmp.ne.s32.totalorder %s97, %s111
      %p113 = scmp.eq.s32.totalorder %s24, 0
      %p114 = por %p112, %p113
      %s116 = sadd.s32 %s115, 1
      %p119 = scmp.eq.s32.totalorder %s18, 1
      %p120 = scmp.ne.s32.totalorder %s115, %s117
      %p121 = scmp.eq.s32.totalorder %s18, 0
      %p122 = por %p120, %p121
      %p123 = scmp.ne.s32.totalorder %s115, %s117
      %p124 = scmp.eq.s32.totalorder %s23, 1
      %p125 = por %p123, %p124
      %p126 = scmp.ne.s32.totalorder %s117, %s118
      %p127 = scmp.eq.s32.totalorder %s23, 0
      %p128 = por %p126, %p127
      %p129 = scmp.ne.s32.totalorder %s117, %s118
      %p130 = scmp.eq.s32.totalorder %s24, 1
      %p131 = por %p129, %p130
      %p133 = scmp.ne.s32.totalorder %s118, %s132
      %p134 = scmp.eq.s32.totalorder %s24, 0
      %p135 = por %p133, %p134
      %s136 = ssub.s32 %s18, %s25
      %p137 = scmp.eq.s32.totalorder %s136, 0
      %s139 = sadd.s32 %s138, 1
      %s140 = scalar_select %p137, %s138, %s139
      %p143 = pneg %p137
      %p144 = scmp.eq.s32.totalorder %s18, 1
      %p145 = por %p143, %p144
      %p146 = scmp.ne.s32.totalorder %s138, %s141
      %p147 = scmp.eq.s32.totalorder %s18, 0
      %p148 = por %p146, %p147
      %p149 = scmp.ne.s32.totalorder %s138, %s141
      %p150 = scmp.eq.s32.totalorder %s23, 1
      %p151 = por %p149, %p150
      %p152 = scmp.ne.s32.totalorder %s141, %s142
      %p153 = scmp.eq.s32.totalorder %s23, 0
      %p154 = por %p152, %p153
      %p155 = scmp.ne.s32.totalorder %s141, %s142
      %p156 = scmp.eq.s32.totalorder %s24, 1
      %p157 = por %p155, %p156
      %p159 = scmp.ne.s32.totalorder %s142, %s158
      %p160 = scmp.eq.s32.totalorder %s24, 0
      %p161 = por %p159, %p160
      %p162 = scmp.le.s32.totalorder 1, %s18
      %p163 = scmp.lt.s32.totalorder %s18, 3
      %p164 = pnand %p162, %p163
      %p165 = pneg %p164
      // Predicated region
      $region9: #{tpu_custom_call.1} parent=5 // pred_check
        _
      $region10: #{tpu_custom_call.1} parent=5 // pred_check_branch
        %167 = sbr.rel (%p164) target = $region12
      $region11: #{tpu_custom_call.1} parent=5 // pred_region
        %s168 = ssub.s32 %s18, 1
        // Predicated region
        $region13: #{tpu_custom_call.1} parent=11 // pred_check
          %p169 = pneg %p65
        $region14: #{tpu_custom_call.1} parent=11 // pred_check_branch
          %171 = sbr.rel (%p169) target = $region16
        $region15: #{tpu_custom_call.1} parent=11 // pred_region
          %s173 = ssub.s32 1536, 1536
          %174 = vsyncadd [#allocation8], %s173
          %s175 = sshll.u32 [#allocation7], 4
          %s176 = int_to_ptr.vmem [resolvable:$true] %s175
          %181 = dma.hbm_to_vmem [thread:$0]  %s1, 1536, %s176, [#allocation8], 64, 64, 4
        $region16: #{tpu_custom_call.1} parent=11 // pred_fallthru
          _
        // Predicated region
        $region17: #{tpu_custom_call.1} parent=11 // pred_check
          %p182 = pneg %p86
        $region18: #{tpu_custom_call.1} parent=11 // pred_check_branch
          %184 = sbr.rel (%p182) target = $region20
        $region19: #{tpu_custom_call.1} parent=11 // pred_region
          _
        $region20: #{tpu_custom_call.1} parent=11 // pred_fallthru
          _
        // Predicated region
        $region21: #{tpu_custom_call.1} parent=11 // pred_check
          %p185 = pneg %p107
        $region22: #{tpu_custom_call.1} parent=11 // pred_check_branch
          %187 = sbr.rel (%p185) target = $region24
        $region23: #{tpu_custom_call.1} parent=11 // pred_region
          %s189 = ssub.s32 3072, 3072
          %190 = vsyncadd [#allocation8], %s189
          %s191 = sshll.u32 [#allocation9], 4
          %s192 = int_to_ptr.vmem [resolvable:$true] %s191
          %197 = dma.hbm_to_vmem [thread:$0]  %s3, 3072, %s192, [#allocation8], 64, 64, 4
        $region24: #{tpu_custom_call.1} parent=11 // pred_fallthru
          _
        // Predicated region
        $region25: #{tpu_custom_call.1} parent=11 // pred_check
          %p198 = pneg %p128
        $region26: #{tpu_custom_call.1} parent=11 // pred_check_branch
          %200 = sbr.rel (%p198) target = $region28
        $region27: #{tpu_custom_call.1} parent=11 // pred_region
          _
        $region28: #{tpu_custom_call.1} parent=11 // pred_fallthru
          _
      $region12: #{tpu_custom_call.1} parent=5 // pred_fallthru
        _
      %p201 = scmp.lt.s32.totalorder %s18, 2
      // Predicated region
      $region29: #{tpu_custom_call.1} parent=5 // pred_check
        %p202 = pneg %p201
      $region30: #{tpu_custom_call.1} parent=5 // pred_check_branch
        %204 = sbr.rel (%p202) target = $region32
      $region31: #{tpu_custom_call.1} parent=5 // pred_region
        // Predicated region
        $region33: #{tpu_custom_call.1} parent=31 // pred_check
          %p205 = pneg %p38
        $region34: #{tpu_custom_call.1} parent=31 // pred_check_branch
          %207 = sbr.rel (%p205) target = $region36
        $region35: #{tpu_custom_call.1} parent=31 // pred_region
          %s208 = sand.u32 %s28, 1
          %s209 = scalar_lea.sflag [#allocation5], %s208
          %s210 = sand.u32 %s28, 1
          %s211 = smul.addr %s210, 16
          %s212 = scalar_lea.vmem [#allocation4], %s211
          %s214 = ssub.s32 256, 256
          %215 = vsyncadd %s209, %s214
          %s216 = smul.addr %s18, 2
          %s217 = smul.addr %s216, 128
          %s218 = scalar_lea.hbm %s0, %s217
          %s219 = sshll.u32 %s212, 4
          %s220 = int_to_ptr.vmem [resolvable:$true] %s219
          %225 = dma.hbm_to_vmem [thread:$0]  %s218, 256, %s220, %s209, 128, 128, 8
        $region36: #{tpu_custom_call.1} parent=31 // pred_fallthru
          _
      $region32: #{tpu_custom_call.1} parent=5 // pred_fallthru
        _
      %p226 = scmp.le.s32.totalorder 1, %s18
      %p227 = scmp.lt.s32.totalorder %s18, 3
      %p228 = pnand %p226, %p227
      %p229 = pneg %p228
      // Predicated region
      $region37: #{tpu_custom_call.1} parent=5 // pred_check
        _
      $region38: #{tpu_custom_call.1} parent=5 // pred_check_branch
        %231 = sbr.rel (%p228) target = $region40
      $region39: #{tpu_custom_call.1} parent=5 // pred_region
        %s232 = ssub.s32 %s18, 1
        %s233 = sand.u32 %s31, 1
        %s234 = scalar_lea.sflag [#allocation5], %s233
        %s235 = sand.u32 %s31, 1
        %s236 = smul.addr %s235, 16
        %s237 = scalar_lea.vmem [#allocation4], %s236
        // Predicated region
        $region41: #{tpu_custom_call.1} parent=39 // pred_check
          %p238 = pneg %p44
        $region42: #{tpu_custom_call.1} parent=39 // pred_check_branch
          %240 = sbr.rel (%p238) target = $region44
        $region43: #{tpu_custom_call.1} parent=39 // pred_region
          %241 = dma.done %s234, 256
        $region44: #{tpu_custom_call.1} parent=39 // pred_fallthru
          _
        // Predicated region
        $region45: #{tpu_custom_call.1} parent=39 // pred_check
          %p242 = pneg %p65
        $region46: #{tpu_custom_call.1} parent=39 // pred_check_branch
          %244 = sbr.rel (%p242) target = $region48
        $region47: #{tpu_custom_call.1} parent=39 // pred_region
          %245 = dma.done [#allocation8], 1536
        $region48: #{tpu_custom_call.1} parent=39 // pred_fallthru
          _
        // Predicated region
        $region49: #{tpu_custom_call.1} parent=39 // pred_check
          %p246 = pneg %p107
        $region50: #{tpu_custom_call.1} parent=39 // pred_check_branch
          %248 = sbr.rel (%p246) target = $region52
        $region51: #{tpu_custom_call.1} parent=39 // pred_region
          %249 = dma.done [#allocation8], 3072
        $region52: #{tpu_custom_call.1} parent=39 // pred_fallthru
          _
        %s250 = sand.u32 %s31, 1
        %s251 = scalar_lea.sflag [#allocation5], %s250
        %s252 = sand.u32 %s31, 1
        %s253 = smul.addr %s252, 16
        %s254 = scalar_lea.vmem [#allocation4], %s253
        %p255 = pneg %p44
        %p256 = pneg %p41
        %p257 = pneg %p65
        %p258 = pneg %p62
        %p259 = pneg %p86
        %p260 = pneg %p83
        %p261 = pneg %p107
        %p262 = pneg %p104
        %p263 = pneg %p128
        %p264 = pneg %p125
        %p265 = pneg %p154
        %p266 = pneg %p151
        %s267 = sand.u32 %s141, 1
        %s268 = scalar_lea.sflag [#allocation6], %s267
        %s269 = sand.u32 %s141, 1
        %s270 = smul.addr %s269, 16
        %s271 = scalar_lea.vmem [#allocation10], %s270
        %vm273 = vcmask 516096
        %274 = vst.msk [vmem:[#allocation2] sm:$0x1] %vm273, 0.0
        %275 = vst.msk [vmem:[#allocation2 + $0x11] sm:$0x1] %vm273, 0.0
        %276 = vst [vmem:[#allocation3] sm:$0x1] 0.0
        %277 = vst [vmem:[#allocation3 + $0x11] sm:$0x1] 0.0
        %v278 = vld [vmem:[%s237] sm:$0xff]
        %v279 = vld [vmem:[%s237 + $0x8] sm:$0xff]
        %vm280 = vcmask 523264
        %281 = vst.msk [vmem:[#allocation2 + $0x1] sm:$0xff] %vm280, %v278
        %282 = vst.msk [vmem:[#allocation2 + $0x9] sm:$0xff] %vm280, %v279
        %v283 = vld [vmem:[#allocation2] sm:$0xff]
        %v284 = vld [vmem:[#allocation2 + $0x8] sm:$0xff]
        %v285 = vld [vmem:[#allocation2 + $0x1] sm:$0xff]
        %v286 = vld [vmem:[#allocation2 + $0x9] sm:$0xff]
        %v287 = vld [vmem:[#allocation2 + $0x2] sm:$0xff]
        %v288 = vld [vmem:[#allocation2 + $0xa] sm:$0xff]
        %291 = vrot.lane.b32.xlu0 %v285, 64
        %v292 = vpop.permute.xlu0 %291
        %293 = vrot.lane.b32.xlu0 %v286, 64
        %v294 = vpop.permute.xlu0 %293
        %v297 = vsel %vm280, %v283, %v292
        %v298 = vsel %vm280, %v284, %v294
        %v299 = vpack.c.bf16 %v298, %v297
        %v300 = vpack.c.bf16 %v288, %v287
        %v301 = vld [vmem:[#allocation7] sm:$0xf]
        %v302 = vld [vmem:[#allocation7 + $0x4] sm:$0xf]
        %v303 = vld [vmem:[#allocation7 + $0x8] sm:$0xf]
        %v304 = vld [vmem:[#allocation7 + $0xc] sm:$0xf]
        %v305 = vld [vmem:[#allocation7 + $0x10] sm:$0xf]
        %v306 = vld [vmem:[#allocation7 + $0x14] sm:$0xf]
        %v307 = vld [vmem:[#allocation7 + $0x18] sm:$0xf]
        %v308 = vld [vmem:[#allocation7 + $0x1c] sm:$0xf]
        %v309 = vld [vmem:[#allocation7 + $0x20] sm:$0xf]
        %v310 = vld [vmem:[#allocation7 + $0x24] sm:$0xf]
        %v311 = vld [vmem:[#allocation7 + $0x28] sm:$0xf]
        %v312 = vld [vmem:[#allocation7 + $0x2c] sm:$0xf]
        %v313 = vld [vmem:[#allocation7 + $0x30] sm:$0xf]
        %v314 = vld [vmem:[#allocation7 + $0x34] sm:$0xf]
        %v315 = vld [vmem:[#allocation7 + $0x38] sm:$0xf]
        %v316 = vld [vmem:[#allocation7 + $0x3c] sm:$0xf]
        %v317 = vld [vmem:[#allocation7 + $0x40] sm:$0xf]
        %v318 = vld [vmem:[#allocation7 + $0x44] sm:$0xf]
        %v319 = vld [vmem:[#allocation7 + $0x48] sm:$0xf]
        %v320 = vld [vmem:[#allocation7 + $0x4c] sm:$0xf]
        %v321 = vld [vmem:[#allocation7 + $0x50] sm:$0xf]
        %v322 = vld [vmem:[#allocation7 + $0x54] sm:$0xf]
        %v323 = vld [vmem:[#allocation7 + $0x58] sm:$0xf]
        %v324 = vld [vmem:[#allocation7 + $0x5c] sm:$0xf]
        %v325 = vld [vmem:[%s2] sm:$0x1]
        %v327 = vlaneseq
        %v328 = vshrl.u32 %v327, 7
        %v329 = vsub.s32 0, %v328
        %v330 = vrot.slane %v325, %v329
        %v356 = vunpack.c.l.b16 %v301
        %v357 = vunpack.c.l.b16 %v302
        %v358 = vunpack.c.l.b16 %v303
        %v359 = vunpack.c.l.b16 %v304
        %v360 = vunpack.c.l.b16 %v305
        %v361 = vunpack.c.l.b16 %v306
        %v362 = vunpack.c.l.b16 %v307
        %v363 = vunpack.c.l.b16 %v308
        %v364 = vunpack.c.l.b16 %v309
        %v365 = vunpack.c.l.b16 %v310
        %v366 = vunpack.c.l.b16 %v311
        %v367 = vunpack.c.l.b16 %v312
        %v368 = vunpack.c.l.b16 %v313
        %v369 = vunpack.c.l.b16 %v314
        %v370 = vunpack.c.l.b16 %v315
        %v371 = vunpack.c.l.b16 %v316
        %v372 = vunpack.c.l.b16 %v317
        %v373 = vunpack.c.l.b16 %v318
        %v374 = vunpack.c.l.b16 %v319
        %v375 = vunpack.c.l.b16 %v320
        %v376 = vunpack.c.l.b16 %v321
        %v377 = vunpack.c.l.b16 %v322
        %v378 = vunpack.c.l.b16 %v323
        %v379 = vunpack.c.l.b16 %v324
        %v380 = vpack.c.b16 %v357, %v356
        %v381 = vpack.c.b16 %v359, %v358
        %v382 = vpack.c.b16 %v361, %v360
        %v383 = vpack.c.b16 %v363, %v362
        %v384 = vpack.c.b16 %v365, %v364
        %v385 = vpack.c.b16 %v367, %v366
        %v386 = vpack.c.b16 %v369, %v368
        %v387 = vpack.c.b16 %v371, %v370
        %v388 = vpack.c.b16 %v373, %v372
        %v389 = vpack.c.b16 %v375, %v374
        %v390 = vpack.c.b16 %v377, %v376
        %v391 = vpack.c.b16 %v379, %v378
        %v405 = vsel %vm280, %v300, 0
        %407 = vmatprep.subr.bf16.mxu0 0
        %408 = vmatpush1.bf16.msra.mxu0 %v380
        %409 = vmatprep.subr.bf16.mxu0 0
        %410 = vmatpush1.bf16.msra.mxu0 %v381
        %411 = vmatprep.subr.bf16.mxu0 0
        %412 = vmatpush1.bf16.msra.mxu0 %v382
        %413 = vmatprep.subr.bf16.mxu0 0
        %414 = vmatpush1.bf16.msra.mxu0 %v383
        %415 = vmatprep.subr.bf16.mxu0 0
        %416 = vmatpush1.bf16.msra.mxu0 %v384
        %417 = vmatprep.subr.bf16.mxu0 0
        %418 = vmatpush1.bf16.msra.mxu0 %v385
        %419 = vmatprep.subr.bf16.mxu0 0
        %420 = vmatpush1.bf16.msra.mxu0 %v386
        %421 = vmatprep.subr.bf16.mxu0 0
        %422 = vmatpush1.bf16.msra.mxu0 %v387
        %423 = vmatprep.subr.bf16.mxu0 0
        %424 = vmatpush1.bf16.msra.mxu0 %v388
        %425 = vmatprep.subr.bf16.mxu0 0
        %426 = vmatpush1.bf16.msra.mxu0 %v389
        %427 = vmatprep.subr.bf16.mxu0 0
        %428 = vmatpush1.bf16.msra.mxu0 %v390
        %429 = vmatprep.subr.bf16.mxu0 0
        %430 = vmatpush1.bf16.msra.mxu0 %v391
        %431 = vmatprep.subr.bf16.mxu0 0
        %432 = vmatpush1.bf16.msra.mxu0 0
        %433 = vmatprep.subr.bf16.mxu0 0
        %434 = vmatpush1.bf16.msra.mxu0 0
        %435 = vmatprep.subr.bf16.mxu0 0
        %436 = vmatpush1.bf16.msra.mxu0 0
        %437 = vmatprep.subr.bf16.mxu0 0
        %438 = vmatpush1.bf16.msra.mxu0 0
        %439 = vmatprep.mubr.bf16.mxu0 %v405
        %440 = vmatmul.mubr.bf16.gmra.mrb[0].mxu0 %v299
        %v441 = vpop.f32.mrb[0].mxu0
        %v442 = vadd.f32 %v330, %v441
        %v443 = vpop.f32.mrb[0].mxu0
        %v444 = vpop.f32.mrb[0].mxu0
        %v445 = vadd.f32 %v330, %v444
        %v446 = vpop.f32.mrb[0].mxu0
        %447 = vdwg.mxu0
        %v448 = vmax.f32 %v442, 0.0
        %v449 = vmax.f32 %v445, 0.0
        %450 = vst [vmem:[#allocation3 + $0x1] sm:$0xff] %v448
        %451 = vst [vmem:[#allocation3 + $0x9] sm:$0xff] %v449
        %v452 = vld [vmem:[#allocation3] sm:$0xff]
        %v453 = vld [vmem:[#allocation3 + $0x8] sm:$0xff]
        %v454 = vld [vmem:[#allocation3 + $0x1] sm:$0xff]
        %v455 = vld [vmem:[#allocation3 + $0x9] sm:$0xff]
        %v456 = vld [vmem:[#allocation3 + $0x2] sm:$0xff]
        %v457 = vld [vmem:[#allocation3 + $0xa] sm:$0xff]
        %v458 = vpack.c.bf16 %v453, %v452
        %v459 = vpack.c.bf16 %v455, %v454
        %v460 = vpack.c.bf16 %v457, %v456
        %v461 = vld [vmem:[#allocation9] sm:$0xf]
        %v462 = vld [vmem:[#allocation9 + $0x4] sm:$0xf]
        %v463 = vld [vmem:[#allocation9 + $0x8] sm:$0xf]
        %v464 = vld [vmem:[#allocation9 + $0xc] sm:$0xf]
        %v465 = vld [vmem:[#allocation9 + $0x10] sm:$0xf]
        %v466 = vld [vmem:[#allocation9 + $0x14] sm:$0xf]
        %v467 = vld [vmem:[#allocation9 + $0x18] sm:$0xf]
        %v468 = vld [vmem:[#allocation9 + $0x1c] sm:$0xf]
        %v469 = vld [vmem:[#allocation9 + $0x20] sm:$0xf]
        %v470 = vld [vmem:[#allocation9 + $0x24] sm:$0xf]
        %v471 = vld [vmem:[#allocation9 + $0x28] sm:$0xf]
        %v472 = vld [vmem:[#allocation9 + $0x2c] sm:$0xf]
        %v473 = vld [vmem:[#allocation9 + $0x30] sm:$0xf]
        %v474 = vld [vmem:[#allocation9 + $0x34] sm:$0xf]
        %v475 = vld [vmem:[#allocation9 + $0x38] sm:$0xf]
        %v476 = vld [vmem:[#allocation9 + $0x3c] sm:$0xf]
        %v477 = vld [vmem:[#allocation9 + $0x40] sm:$0xf]
        %v478 = vld [vmem:[#allocation9 + $0x44] sm:$0xf]
        %v479 = vld [vmem:[#allocation9 + $0x48] sm:$0xf]
        %v480 = vld [vmem:[#allocation9 + $0x4c] sm:$0xf]
        %v481 = vld [vmem:[#allocation9 + $0x50] sm:$0xf]
        %v482 = vld [vmem:[#allocation9 + $0x54] sm:$0xf]
        %v483 = vld [vmem:[#allocation9 + $0x58] sm:$0xf]
        %v484 = vld [vmem:[#allocation9 + $0x5c] sm:$0xf]
        %v485 = vld [vmem:[#allocation9 + $0x60] sm:$0xf]
        %v486 = vld [vmem:[#allocation9 + $0x64] sm:$0xf]
        %v487 = vld [vmem:[#allocation9 + $0x68] sm:$0xf]
        %v488 = vld [vmem:[#allocation9 + $0x6c] sm:$0xf]
        %v489 = vld [vmem:[#allocation9 + $0x70] sm:$0xf]
        %v490 = vld [vmem:[#allocation9 + $0x74] sm:$0xf]
        %v491 = vld [vmem:[#allocation9 + $0x78] sm:$0xf]
        %v492 = vld [vmem:[#allocation9 + $0x7c] sm:$0xf]
        %v493 = vld [vmem:[#allocation9 + $0x80] sm:$0xf]
        %v494 = vld [vmem:[#allocation9 + $0x84] sm:$0xf]
        %v495 = vld [vmem:[#allocation9 + $0x88] sm:$0xf]
        %v496 = vld [vmem:[#allocation9 + $0x8c] sm:$0xf]
        %v497 = vld [vmem:[#allocation9 + $0x90] sm:$0xf]
        %v498 = vld [vmem:[#allocation9 + $0x94] sm:$0xf]
        %v499 = vld [vmem:[#allocation9 + $0x98] sm:$0xf]
        %v500 = vld [vmem:[#allocation9 + $0x9c] sm:$0xf]
        %v501 = vld [vmem:[#allocation9 + $0xa0] sm:$0xf]
        %v502 = vld [vmem:[#allocation9 + $0xa4] sm:$0xf]
        %v503 = vld [vmem:[#allocation9 + $0xa8] sm:$0xf]
        %v504 = vld [vmem:[#allocation9 + $0xac] sm:$0xf]
        %v505 = vld [vmem:[#allocation9 + $0xb0] sm:$0xf]
        %v506 = vld [vmem:[#allocation9 + $0xb4] sm:$0xf]
        %v507 = vld [vmem:[#allocation9 + $0xb8] sm:$0xf]
        %v508 = vld [vmem:[#allocation9 + $0xbc] sm:$0xf]
        %v509 = vld [vmem:[%s4] sm:$0x1]
        %v511 = vlaneseq
        %v512 = vshrl.u32 %v511, 7
        %v513 = vsub.s32 0, %v512
        %v514 = vrot.slane %v509, %v513
        %v564 = vunpack.c.l.b16 %v461
        %v565 = vunpack.c.l.b16 %v462
        %v566 = vunpack.c.l.b16 %v463
        %v567 = vunpack.c.l.b16 %v464
        %v568 = vunpack.c.l.b16 %v465
        %v569 = vunpack.c.l.b16 %v466
        %v570 = vunpack.c.l.b16 %v467
        %v571 = vunpack.c.l.b16 %v468
        %v572 = vunpack.c.l.b16 %v469
        %v573 = vunpack.c.l.b16 %v470
        %v574 = vunpack.c.l.b16 %v471
        %v575 = vunpack.c.l.b16 %v472
        %v576 = vunpack.c.l.b16 %v473
        %v577 = vunpack.c.l.b16 %v474
        %v578 = vunpack.c.l.b16 %v475
        %v579 = vunpack.c.l.b16 %v476
        %v580 = vunpack.c.l.b16 %v477
        %v581 = vunpack.c.l.b16 %v478
        %v582 = vunpack.c.l.b16 %v479
        %v583 = vunpack.c.l.b16 %v480
        %v584 = vunpack.c.l.b16 %v481
        %v585 = vunpack.c.l.b16 %v482
        %v586 = vunpack.c.l.b16 %v483
        %v587 = vunpack.c.l.b16 %v484
        %v588 = vunpack.c.l.b16 %v485
        %v589 = vunpack.c.l.b16 %v486
        %v590 = vunpack.c.l.b16 %v487
        %v591 = vunpack.c.l.b16 %v488
        %v592 = vunpack.c.l.b16 %v489
        %v593 = vunpack.c.l.b16 %v490
        %v594 = vunpack.c.l.b16 %v491
        %v595 = vunpack.c.l.b16 %v492
        %v596 = vunpack.c.l.b16 %v493
        %v597 = vunpack.c.l.b16 %v494
        %v598 = vunpack.c.l.b16 %v495
        %v599 = vunpack.c.l.b16 %v496
        %v600 = vunpack.c.l.b16 %v497
        %v601 = vunpack.c.l.b16 %v498
        %v602 = vunpack.c.l.b16 %v499
        %v603 = vunpack.c.l.b16 %v500
        %v604 = vunpack.c.l.b16 %v501
        %v605 = vunpack.c.l.b16 %v502
        %v606 = vunpack.c.l.b16 %v503
        %v607 = vunpack.c.l.b16 %v504
        %v608 = vunpack.c.l.b16 %v505
        %v609 = vunpack.c.l.b16 %v506
        %v610 = vunpack.c.l.b16 %v507
        %v611 = vunpack.c.l.b16 %v508
        %v612 = vpack.c.b16 %v565, %v564
        %v613 = vpack.c.b16 %v567, %v566
        %v614 = vpack.c.b16 %v569, %v568
        %v615 = vpack.c.b16 %v571, %v570
        %v616 = vpack.c.b16 %v573, %v572
        %v617 = vpack.c.b16 %v575, %v574
        %v618 = vpack.c.b16 %v577, %v576
        %v619 = vpack.c.b16 %v579, %v578
        %v620 = vpack.c.b16 %v581, %v580
        %v621 = vpack.c.b16 %v583, %v582
        %v622 = vpack.c.b16 %v585, %v584
        %v623 = vpack.c.b16 %v587, %v586
        %v624 = vpack.c.b16 %v589, %v588
        %v625 = vpack.c.b16 %v591, %v590
        %v626 = vpack.c.b16 %v593, %v592
        %v627 = vpack.c.b16 %v595, %v594
        %v628 = vpack.c.b16 %v597, %v596
        %v629 = vpack.c.b16 %v599, %v598
        %v630 = vpack.c.b16 %v601, %v600
        %v631 = vpack.c.b16 %v603, %v602
        %v632 = vpack.c.b16 %v605, %v604
        %v633 = vpack.c.b16 %v607, %v606
        %v634 = vpack.c.b16 %v609, %v608
        %v635 = vpack.c.b16 %v611, %v610
        %660 = vmatprep.subr.bf16.mxu0 0
        %661 = vmatpush1.bf16.msra.mxu0 %v612
        %662 = vmatprep.subr.bf16.mxu0 0
        %663 = vmatpush1.bf16.msra.mxu0 %v613
        %664 = vmatprep.subr.bf16.mxu0 0
        %665 = vmatpush1.bf16.msra.mxu0 %v614
        %666 = vmatprep.subr.bf16.mxu0 0
        %667 = vmatpush1.bf16.msra.mxu0 %v615
        %668 = vmatprep.subr.bf16.mxu0 0
        %669 = vmatpush1.bf16.msra.mxu0 %v616
        %670 = vmatprep.subr.bf16.mxu0 0
        %671 = vmatpush1.bf16.msra.mxu0 %v617
        %672 = vmatprep.subr.bf16.mxu0 0
        %673 = vmatpush1.bf16.msra.mxu0 %v618
        %674 = vmatprep.subr.bf16.mxu0 0
        %675 = vmatpush1.bf16.msra.mxu0 %v619
        %676 = vmatprep.subr.bf16.mxu0 0
        %677 = vmatpush1.bf16.msra.mxu0 %v620
        %678 = vmatprep.subr.bf16.mxu0 0
        %679 = vmatpush1.bf16.msra.mxu0 %v621
        %680 = vmatprep.subr.bf16.mxu0 0
        %681 = vmatpush1.bf16.msra.mxu0 %v622
        %682 = vmatprep.subr.bf16.mxu0 0
        %683 = vmatpush1.bf16.msra.mxu0 %v623
        %684 = vmatprep.subr.bf16.mxu0 0
        %685 = vmatpush1.bf16.msra.mxu0 %v624
        %686 = vmatprep.subr.bf16.mxu0 0
        %687 = vmatpush1.bf16.msra.mxu0 %v625
        %688 = vmatprep.subr.bf16.mxu0 0
        %689 = vmatpush1.bf16.msra.mxu0 %v626
        %690 = vmatprep.subr.bf16.mxu0 0
        %691 = vmatpush1.bf16.msra.mxu0 %v627
        %692 = vmatprep.mubr.bf16.mxu0 %v459
        %693 = vmatmul.mubr.bf16.gmra.mrb[0].mxu0 %v458
        %v694 = vpop.f32.mrb[0].mxu0
        %v695 = vadd.f32 %v514, %v694
        %v696 = vpop.f32.mrb[0].mxu0
        %v697 = vpop.f32.mrb[0].mxu0
        %v698 = vadd.f32 %v514, %v697
        %v699 = vpop.f32.mrb[0].mxu0
        %700 = vdwg.mxu0
        %701 = vmatprep.subr.bf16.mxu0 0
        %702 = vmatpush1.bf16.msra.mxu0 %v628
        %703 = vmatprep.subr.bf16.mxu0 0
        %704 = vmatpush1.bf16.msra.mxu0 %v629
        %705 = vmatprep.subr.bf16.mxu0 0
        %706 = vmatpush1.bf16.msra.mxu0 %v630
        %707 = vmatprep.subr.bf16.mxu0 0
        %708 = vmatpush1.bf16.msra.mxu0 %v631
        %709 = vmatprep.subr.bf16.mxu0 0
        %710 = vmatpush1.bf16.msra.mxu0 %v632
        %711 = vmatprep.subr.bf16.mxu0 0
        %712 = vmatpush1.bf16.msra.mxu0 %v633
        %713 = vmatprep.subr.bf16.mxu0 0
        %714 = vmatpush1.bf16.msra.mxu0 %v634
        %715 = vmatprep.subr.bf16.mxu0 0
        %716 = vmatpush1.bf16.msra.mxu0 %v635
        %717 = vmatprep.subr.bf16.mxu0 0
        %718 = vmatpush1.bf16.msra.mxu0 0
        %719 = vmatprep.subr.bf16.mxu0 0
        %720 = vmatpush1.bf16.msra.mxu0 0
        %721 = vmatprep.subr.bf16.mxu0 0
        %722 = vmatpush1.bf16.msra.mxu0 0
        %723 = vmatprep.subr.bf16.mxu0 0
        %724 = vmatpush1.bf16.msra.mxu0 0
        %725 = vmatprep.subr.bf16.mxu0 0
        %726 = vmatpush1.bf16.msra.mxu0 0
        %727 = vmatprep.subr.bf16.mxu0 0
        %728 = vmatpush1.bf16.msra.mxu0 0
        %729 = vmatprep.subr.bf16.mxu0 0
        %730 = vmatpush1.bf16.msra.mxu0 0
        %731 = vmatprep.subr.bf16.mxu0 0
        %732 = vmatpush1.bf16.msra.mxu0 0
        %733 = vmatprep.mubr.bf16.mxu0 0
        %734 = vmatmul.mubr.bf16.gmra.mrb[0].mxu0 %v460
        %v735 = vpop.f32.mrb[0].mxu0
        %v736 = vadd.f32 %v695, %v735
        %v737 = vpop.f32.mrb[0].mxu0
        %v738 = vpop.f32.mrb[0].mxu0
        %v739 = vadd.f32 %v698, %v738
        %v740 = vpop.f32.mrb[0].mxu0
        %741 = vdwg.mxu0
        %v742 = vmax.f32 %v736, 0.0
        %v743 = vmax.f32 %v739, 0.0
        %744 = vst [vmem:[%s271] sm:$0xff] %v742
        %745 = vst [vmem:[%s271 + $0x8] sm:$0xff] %v743
        %s746 = sand.u32 %s141, 1
        %s747 = scalar_lea.sflag [#allocation6], %s746
        %s748 = sand.u32 %s141, 1
        %s749 = smul.addr %s748, 16
        %s750 = scalar_lea.vmem [#allocation10], %s749
        // Predicated region
        $region53: #{tpu_custom_call.1} parent=39 // pred_check
          %p751 = pneg %p151
        $region54: #{tpu_custom_call.1} parent=39 // pred_check_branch
          %753 = sbr.rel (%p751) target = $region56
        $region55: #{tpu_custom_call.1} parent=39 // pred_region
          %s755 = ssub.s32 256, 256
          %756 = vsyncadd %s747, %s755
          %s757 = smul.addr %s23, 2
          %s758 = smul.addr %s757, 128
          %s759 = scalar_lea.hbm %s5, %s758
          %s760 = sshll.u32 %s750, 4
          %s761 = int_to_ptr.vmem [resolvable:$true] %s760
          %766 = dma.vmem_to_hbm [thread:$0]  %s761, 256, %s759, %s747, 128, 128, 8
        $region56: #{tpu_custom_call.1} parent=39 // pred_fallthru
          _
      $region40: #{tpu_custom_call.1} parent=5 // pred_fallthru
        _
      %p767 = scmp.le.s32.totalorder 2, %s18
      // Predicated region
      $region57: #{tpu_custom_call.1} parent=5 // pred_check
        %p768 = pneg %p767
      $region58: #{tpu_custom_call.1} parent=5 // pred_check_branch
        %770 = sbr.rel (%p768) target = $region60
      $region59: #{tpu_custom_call.1} parent=5 // pred_region
        %s771 = ssub.s32 %s18, 2
        // Predicated region
        $region61: #{tpu_custom_call.1} parent=59 // pred_check
          %p772 = pneg %p157
        $region62: #{tpu_custom_call.1} parent=59 // pred_check_branch
          %774 = sbr.rel (%p772) target = $region64
        $region63: #{tpu_custom_call.1} parent=59 // pred_region
          %s775 = sand.u32 %s142, 1
          %s776 = scalar_lea.sflag [#allocation6], %s775
          %s777 = sand.u32 %s142, 1
          %s778 = smul.addr %s777, 16
          %s779 = scalar_lea.vmem [#allocation10], %s778
          %780 = dma.done %s776, 256
        $region64: #{tpu_custom_call.1} parent=59 // pred_fallthru
          _
      $region60: #{tpu_custom_call.1} parent=5 // pred_fallthru
        _
    $region6: #{tpu_custom_call.1} parent=1 // loop_footer
      %s22 = sadd.s32 1, %s18
    $region7: #{tpu_custom_call.1} parent=1 // loop_footer_branch
      %17 = sbr.rel target = $region3
    $region8: #{tpu_custom_call.1} parent=1 // loop_exit
      _
    %781 = vsyncpa [#allocation5], 1
    %s782 = scalar_lea.sflag [#allocation5], 1
    %783 = vsyncpa %s782, 1
    %784 = vsyncpa [#allocation8], 1
    %785 = vsyncpa [#allocation6], 1
    %s786 = scalar_lea.sflag [#allocation6], 1
    %787 = vsyncpa %s786, 1

</llo_original>
